<compile_context>
chip_gen: v7x
topology: tpu7x:2x2x1
jax: 0.10.0
libtpu: 0.0.40
codegen_flags: <defaults>
</compile_context>

<pallas_src>
import jax
import jax.numpy as jnp
from jax.experimental import pallas as pl
from jax.experimental.pallas import tpu as pltpu


_TARGET_BLOCK_BYTES = 4 * 1024 * 1024   # ~86% of HBM roofline per measured tiling data
_VMEM_LIMIT_BYTES = 48 * 1024 * 1024    # 2x(in)+2x(out) pipeline copies + roll temporaries;
                                        # > v5e's 16 MiB default, < v7x's 64 MiB physical.


def _round_up(x: int, m: int) -> int:
    return ((x + m - 1) // m) * m


def _jitter_kernel(sel_ref, x_ref, o_ref):
    """sel_ref: (1, Tp) int32 in {-1, 0, +1}; x_ref / o_ref: (block_R, Tp).

    Requires Tp % 128 == 0 (lane-aligned XLU rolls) and that the selector never
    picks the circular-wrap value (sel[0] != -1, sel[T-1] != +1).
    """
    x = x_ref[...]
    tp = x.shape[-1]
    prev = pltpu.roll(x, 1, 1)        # prev[:, i] = x[:, i-1]  (wrap at i=0: never selected)
    nxt = pltpu.roll(x, tp - 1, 1)    # nxt[:, i]  = x[:, i+1]  (wrap at i=T-1: never selected)
    sel = sel_ref[...]                # compare once per column; broadcast as bool in the select
    take_next = sel == 1
    take_prev = sel == -1
    o_ref[...] = jnp.where(take_next, nxt, jnp.where(take_prev, prev, x))


def jitter_selector(key: jax.Array, length: int, probability: float) -> jax.Array:
    """Per-timestep selector: -1 -> take t-1, +1 -> take t+1, 0 -> keep. int32, shape (T,)."""
    if length <= 1:
        # No valid neighbor exists; never replace (the PyTorch loop would index OOB here).
        return jnp.zeros((length,), jnp.int32)
    k_rep, k_dir = jax.random.split(key)
    replace = jax.random.bernoulli(k_rep, p=probability, shape=(length,))
    direction = jnp.where(
        jax.random.bernoulli(k_dir, p=0.5, shape=(length,)), 1, -1
    ).astype(jnp.int32)
    i = jnp.arange(length, dtype=jnp.int32)
    # Edge handling matches the reference: i==0 -> +1, i==length-1 -> -1, else +/-1.
    step = jnp.where(i == 0, 1, jnp.where(i == length - 1, -1, direction))
    return jnp.where(replace, step, 0).astype(jnp.int32)


def _choose_block_rows(rows_total: int, tp: int, itemsize: int, packing: int) -> int:
    """Row-block size from a byte budget, rounded to the dtype sublane packing."""
    bytes_per_row = tp * itemsize
    rows = (_TARGET_BLOCK_BYTES // bytes_per_row) // packing * packing
    rows = max(rows, packing)                          # at least one packed sublane group
    rows = min(rows, _round_up(rows_total, packing))   # no bigger than the (rounded) row count
    # Megacore: keep >= 2 row blocks (even count when small) so the "parallel"
    # grid axis splits evenly across v7x's two TensorCores.
    nblk = pl.cdiv(rows_total, rows)
    if nblk == 1 and rows_total > packing:
        nblk = 2
    elif 1 < nblk <= 8 and nblk % 2 == 1:
        nblk += 1
    rows = min(rows, max(packing, _round_up(pl.cdiv(rows_total, nblk), packing)))
    return rows


def jitter_apply_pallas(
    quantized: jax.Array, sel: jax.Array, *, donate_input: bool = False
) -> jax.Array:
    """Apply out[:, :, i] = quantized[:, :, i + sel[i]] with a roll+select kernel.

    Invariant (guaranteed by jitter_selector): sel[0] != -1 and sel[T-1] != +1,
    otherwise the circular-roll wrap value would leak into the result.
    """
    B, C, T = quantized.shape
    dtype = quantized.dtype
    if T <= 1:
        return quantized

    R = B * C
    x = quantized.reshape(R, T)                    # contiguous dims -> free reshape, no copy

    itemsize = jnp.dtype(dtype).itemsize
    packing = max(8, 8 * (4 // itemsize))          # sublane packing: 8 f32, 16 bf16, 32 int8
    tp = max(_round_up(T, 128), 128)               # lane block >= T; edge lanes masked on store
    block_r = _choose_block_rows(R, tp, itemsize, packing)

    # Selector row padded to the lane block (tiny (T,) int32 vector -> negligible traffic).
    sel_row = sel.astype(jnp.int32)
    if tp != T:
        sel_row = jnp.pad(sel_row, (0, tp - T))
    sel_row = sel_row.reshape(1, tp)

    out = pl.pallas_call(
        _jitter_kernel,
        out_shape=jax.ShapeDtypeStruct((R, T), dtype),
        grid=(pl.cdiv(R, block_r),),
        in_specs=[
            pl.BlockSpec((1, tp), lambda r: (0, 0)),         # selector row, shared by all blocks
            pl.BlockSpec((block_r, tp), lambda r: (r, 0)),   # input row block (edges masked)
        ],
        out_specs=pl.BlockSpec((block_r, tp), lambda r: (r, 0)),
        compiler_params=pltpu.CompilerParams(
            dimension_semantics=("parallel",),               # row blocks independent (v7x 2 TCs)
            vmem_limit_bytes=_VMEM_LIMIT_BYTES,
        ),
        input_output_aliases=({1: 0} if donate_input else {}),
    )(sel_row, x)
    return out.reshape(B, C, T)


def jitter_pallas(
    quantized: jax.Array, key: jax.Array, probability: float = 0.12
) -> jax.Array:
    """Drop-in Jitter forward: quantized (B, C, T) -> jittered (B, C, T)."""
    _, _, T = quantized.shape
    if T <= 1:
        return quantized
    sel = jitter_selector(key, T, probability)
    return jitter_apply_pallas(quantized, sel)


if __name__ == "__main__":
    key = jax.random.PRNGKey(0)
    k_data, k_jit, k_data2, k_jit2 = jax.random.split(key, 4)

    # Primary case (module-sized): B=2, C=4, T=16.
    B, C, T = 2, 4, 16
    x = jax.random.normal(k_data, (B, C, T), dtype=jnp.float32)
    out = jax.block_until_ready(jitter_pallas(x, k_jit, probability=0.12))

    sel = jitter_selector(k_jit, T, 0.12)
    ref = x[:, :, jnp.arange(T, dtype=jnp.int32) + sel]
    assert out.shape == x.shape and out.dtype == x.dtype
    assert bool(jnp.array_equal(out, ref)), "Pallas jitter mismatch vs reference gather"

    # Ragged case: rows (B*C=10) and time (T=20) both off native tiling ->
    # exercises the masked edge blocks that replaced the wrapper-side pad/slice.
    B2, C2, T2 = 2, 5, 20
    x2 = jax.random.normal(k_data2, (B2, C2, T2), dtype=jnp.float32)
    out2 = jax.block_until_ready(jitter_pallas(x2, k_jit2, probability=0.12))
    sel2 = jitter_selector(k_jit2, T2, 0.12)
    ref2 = x2[:, :, jnp.arange(T2, dtype=jnp.int32) + sel2]
    assert bool(jnp.array_equal(out2, ref2)), "Pallas jitter mismatch (ragged shapes)"

    print("KERNEL_OK")
</pallas_src>

<mosaic_0001>
module attributes {stable_mosaic.version = 11 : i64} {
  func.func @_jitter_kernel(%arg0: i32, %arg1: memref<1x128xi32, #tpu.memory_space<vmem>>, %arg2: memref<8x128xf32, #tpu.memory_space<vmem>>, %arg3: memref<8x128xf32, #tpu.memory_space<vmem>>) attributes {dimension_semantics = [#tpu.dimension_semantics<parallel>], iteration_bounds = array<i64: 1>, scalar_prefetch = 0 : i64, scratch_operands = 0 : i64, tpu.core_type = #tpu.core_type<tc>, window_params = [{pipeline_mode = #tpu.pipeline_mode<synchronous>, transform_indices = @transform_0, window_bounds = array<i64: 1, 128>}, {transform_indices = @transform_1, window_bounds = array<i64: 8, 128>}, {transform_indices = @transform_2, window_bounds = array<i64: 8, 128>}]} {
    %c0 = arith.constant 0 : index
    %c0_0 = arith.constant 0 : index
    %0 = vector.load %arg2[%c0, %c0_0] : memref<8x128xf32, #tpu.memory_space<vmem>>, vector<8x128xf32>
    %c1_i32 = arith.constant 1 : i32
    %1 = tpu.dynamic_rotate %0 by %c1_i32 dim 1 : vector<8x128xf32>, i32 -> vector<8x128xf32>
    %c127_i32 = arith.constant 127 : i32
    %2 = tpu.dynamic_rotate %0 by %c127_i32 dim 1 : vector<8x128xf32>, i32 -> vector<8x128xf32>
    %c0_1 = arith.constant 0 : index
    %c0_2 = arith.constant 0 : index
    %3 = vector.load %arg1[%c0_1, %c0_2] : memref<1x128xi32, #tpu.memory_space<vmem>>, vector<1x128xi32>
    %c1_i32_3 = arith.constant 1 : i32
    %4 = vector.broadcast %c1_i32_3 : i32 to vector<1x128xi32>
    %5 = arith.cmpi eq, %3, %4 : vector<1x128xi32>
    %c-1_i32 = arith.constant -1 : i32
    %6 = vector.broadcast %c-1_i32 : i32 to vector<1x128xi32>
    %7 = arith.cmpi eq, %3, %6 : vector<1x128xi32>
    %8 = vector.shape_cast %7 : vector<1x128xi1> to vector<1x128xi1>
    %9 = vector.broadcast %8 : vector<1x128xi1> to vector<8x128xi1>
    %10 = arith.select %9, %1, %0 : vector<8x128xi1>, vector<8x128xf32>
    %11 = vector.shape_cast %5 : vector<1x128xi1> to vector<1x128xi1>
    %12 = vector.broadcast %11 : vector<1x128xi1> to vector<8x128xi1>
    %13 = arith.select %12, %2, %10 : vector<8x128xi1>, vector<8x128xf32>
    %c0_4 = arith.constant 0 : index
    %c0_5 = arith.constant 0 : index
    %14 = vector.load %arg3[%c0_4, %c0_5] : memref<8x128xf32, #tpu.memory_space<vmem>>, vector<8x128xf32>
    tpu.vector_store %arg3[%c0_4, %c0_5], %13 {strides = array<i32>} : memref<8x128xf32, #tpu.memory_space<vmem>>, vector<8x128xf32>,
    return
  }
  func.func @transform_0(%arg0: i32) -> (i32, i32) {
    %c0_i32 = arith.constant 0 : i32
    %c0_i32_0 = arith.constant 0 : i32
    %c0_i32_1 = arith.constant 0 : i32
    return %c0_i32, %c0_i32_0 : i32, i32
  }
  func.func @transform_1(%arg0: i32) -> (i32, i32) {
    %c0_i32 = arith.constant 0 : i32
    %c0_i32_0 = arith.constant 0 : i32
    return %arg0, %c0_i32 : i32, i32
  }
  func.func @transform_2(%arg0: i32) -> (i32, i32) {
    %c0_i32 = arith.constant 0 : i32
    %c0_i32_0 = arith.constant 0 : i32
    return %arg0, %c0_i32 : i32, i32
  }
}

</mosaic_0001>

<llo_original>
// kernel: tpu_custom_call.1
$region0: #{tpu_custom_call.1}
  #allocation0 [shape = 'u32[]', space=smem, size = 0x4, offset = 0x4, fixed_abs, tag = 'smem constant byte address 0x4 - core index']
  #allocation1 [shape = 'u32[144,128]{1,0:T(1,128)}', space=vmem, size = 0x12000, scoped, tag = 'internal scratch']
  %s0 = inlined_call_operand.hbm [shape: s32[1,128], index: 0, kind: input, shape index: {}]
  %s1 = inlined_call_operand.hbm [shape: f32[8,16], index: 1, kind: input, shape index: {}]
  %s2 = inlined_call_operand.hbm [shape: f32[8,16], index: 2, kind: output, shape index: {}]
  %s3 = sld [smem:[#allocation0]]
  $region26: #{tpu_custom_call.1} parent=0
    _
  %s5 = ssub.s32 1, %s3
  %s6 = scalar_select 0, %s5, %s3
  $region1: #{tpu_custom_call.1} parent=0
    #allocation2 [shape = 'u8[512]{0}', space=vmem, size = 0x400, scoped, tag = 'input window, operand 0, single buffered']
    #allocation3 [shape = 's32[1]{0}', space=sflag, size = 0x4, scoped, tag = 'scoped memory for tpu_custom_call.1']
    #allocation4 [shape = 's32[1]{0}', space=sflag, size = 0x4, scoped, tag = 'scoped memory for tpu_custom_call.1']
    #allocation5 [shape = 'u8[4096]{0}', space=vmem, size = 0x1000, scoped, tag = 'input window, operand 1, single buffered']
    #allocation6 [shape = 's32[1]{0}', space=sflag, size = 0x4, scoped, tag = 'scoped memory for tpu_custom_call.1']
    #allocation7 [shape = 'u8[4096]{0}', space=vmem, size = 0x1000, scoped, tag = 'output window, operand 0, single buffered']
    %7 = vsyncpa [#allocation3], 0
    %8 = vsyncpa [#allocation6], 0
    %9 = vsyncpa [#allocation4], 0
    // Predicated region
    $region2: #{tpu_custom_call.1} parent=1 // pred_check
      _
    $region3: #{tpu_custom_call.1} parent=1 // pred_check_branch
      %11 = sbr.rel (0) target = $region5
    $region4: #{tpu_custom_call.1} parent=1 // pred_region
      %s13 = ssub.s32 16, 16
      %14 = vsyncadd [#allocation3], %s13
      %s16 = sshll.u32 [#allocation2], 4
      %s17 = int_to_ptr.vmem [resolvable:$true] %s16
      %19 = dma.hbm_to_vmem [thread:$0]  %s0, 16, %s17, [#allocation3]
    $region5: #{tpu_custom_call.1} parent=1 // pred_fallthru
      _
    // Predicated region
    $region6: #{tpu_custom_call.1} parent=1 // pred_check
      _
    $region7: #{tpu_custom_call.1} parent=1 // pred_check_branch
      %21 = sbr.rel (0) target = $region9
    $region8: #{tpu_custom_call.1} parent=1 // pred_region
      %s23 = ssub.s32 128, 128
      %24 = vsyncadd [#allocation6], %s23
      %s26 = sshll.u32 [#allocation5], 4
      %s27 = int_to_ptr.vmem [resolvable:$true] %s26
      %29 = dma.hbm_to_vmem [thread:$0]  %s1, 128, %s27, [#allocation6]
    $region9: #{tpu_custom_call.1} parent=1 // pred_fallthru
      _
    // Predicated region
    $region10: #{tpu_custom_call.1} parent=1 // pred_check
      _
    $region11: #{tpu_custom_call.1} parent=1 // pred_check_branch
      %31 = sbr.rel (0) target = $region13
    $region12: #{tpu_custom_call.1} parent=1 // pred_region
      %32 = dma.done [#allocation3], 16
    $region13: #{tpu_custom_call.1} parent=1 // pred_fallthru
      _
    // Predicated region
    $region14: #{tpu_custom_call.1} parent=1 // pred_check
      _
    $region15: #{tpu_custom_call.1} parent=1 // pred_check_branch
      %34 = sbr.rel (0) target = $region17
    $region16: #{tpu_custom_call.1} parent=1 // pred_region
      %35 = dma.done [#allocation6], 128
    $region17: #{tpu_custom_call.1} parent=1 // pred_fallthru
      _
    %v36 = vld [vmem:[#allocation5] sm:$0xff]
    %37 = vrot.lane.b32.xlu0 %v36, 1
    %v38 = vpop.permute.xlu0 %37
    %39 = vrot.lane.b32.xlu0 %v36, 127
    %v40 = vpop.permute.xlu0 %39
    %v41 = vld [vmem:[#allocation2] sm:$0x1]
    %vm42 = vcmp.eq.s32.totalorder %v41, 1
    %vm43 = vcmp.eq.s32.totalorder %v41, 4294967295
    %v44 = vsel %vm43, 1, 0
    %v45 = vlaneseq
    %v46 = vshrl.u32 %v45, 7
    %v47 = vsub.s32 0, %v46
    %v48 = vrot.slane %v44, %v47
    %vm49 = vcmp.eq.s32.totalorder %v48, 1
    %v50 = vsel %vm49, %v38, %v36
    %v51 = vsel %vm42, 1, 0
    %v52 = vlaneseq
    %v53 = vshrl.u32 %v52, 7
    %v54 = vsub.s32 0, %v53
    %v55 = vrot.slane %v51, %v54
    %vm56 = vcmp.eq.s32.totalorder %v55, 1
    %v57 = vsel %vm56, %v40, %v50
    %58 = vst [vmem:[#allocation7] sm:$0xff] %v57
    // Predicated region
    $region18: #{tpu_custom_call.1} parent=1 // pred_check
      _
    $region19: #{tpu_custom_call.1} parent=1 // pred_check_branch
      %60 = sbr.rel (0) target = $region21
    $region20: #{tpu_custom_call.1} parent=1 // pred_region
      %s62 = ssub.s32 128, 128
      %63 = vsyncadd [#allocation4], %s62
      %s65 = sshll.u32 [#allocation7], 4
      %s66 = int_to_ptr.vmem [resolvable:$true] %s65
      %68 = dma.vmem_to_hbm [thread:$0]  %s66, 128, %s2, [#allocation4]
    $region21: #{tpu_custom_call.1} parent=1 // pred_fallthru
      _
    // Predicated region
    $region22: #{tpu_custom_call.1} parent=1 // pred_check
      _
    $region23: #{tpu_custom_call.1} parent=1 // pred_check_branch
      %70 = sbr.rel (0) target = $region25
    $region24: #{tpu_custom_call.1} parent=1 // pred_region
      %71 = dma.done [#allocation4], 128
    $region25: #{tpu_custom_call.1} parent=1 // pred_fallthru
      _
    %72 = vsyncpa [#allocation3], 1
    %73 = vsyncpa [#allocation6], 1
    %74 = vsyncpa [#allocation4], 1

</llo_original>
